<compile_context>
chip_gen: v7x
topology: tpu7x:2x2x1
jax: 0.10.0
libtpu: 0.0.40
codegen_flags: <defaults>
</compile_context>

<pallas_src>
import jax
import jax.numpy as jnp
from jax.experimental import pallas as pl
from jax.experimental.pallas import tpu as pltpu


def _round_up(x, m):
    return ((x + m - 1) // m) * m


def classifier_kernel(x_ref, m_ref, inv_ref, wp_ref, bp_ref, wf_ref, bf_ref,
                      out_ref, acc_ref):
    # x_ref  : (TB, TS, E) bf16   token hidden states tile (E unpadded, full last dim)
    # m_ref  : (TB, TS)    bf16   exact 0/1 attention-mask tile
    # inv_ref: (TB, 1)     f32    1 / max(sum(mask), 1) per batch row
    # wp_ref : (E, E) f32,  bp_ref: (1, E)  f32   pooler dense (tanh)
    # wf_ref : (E, LP) f32, bf_ref: (1, LP) f32   fc Linear (transposed vs torch, lane-padded)
    # out_ref: (TB, LP) f32   lane-dense logits tile
    # acc_ref: (TB, E)  f32   VMEM masked-sum accumulator (resident across seq tiles)
    si = pl.program_id(1)

    @pl.when(si == 0)
    def _init():
        acc_ref[...] = jnp.zeros_like(acc_ref)

    # Masked partial sums on the MXU, fed bf16 directly (no full-tile f32 upcast):
    # one (1, TS) @ (TS, E) dot per batch row, accumulated straight into the f32
    # accumulator slice (no concatenate, no per-row temporaries).
    tb = acc_ref.shape[0]
    for b in range(tb):  # small static trip count (TB <= 8 by construction)
        acc_ref[b:b + 1, :] += jnp.dot(
            m_ref[b:b + 1, :], x_ref[b],
            preferred_element_type=jnp.float32)

    @pl.when(si == pl.num_programs(1) - 1)
    def _finalize():
        # masked mean: apply the f32 reciprocal count once (mask itself is exact 0/1).
        pooled = acc_ref[...] * inv_ref[...]                       # (TB, E) f32
        # pooler: tanh(pooled @ Wp + bp)  (mimics `.pooler_output`)
        h = jnp.tanh(
            jnp.dot(pooled, wp_ref[...], preferred_element_type=jnp.float32)
            + bp_ref[...])
        # fc: logits = h @ Wf + bf   (lane-dense LP-wide unmasked store)
        out_ref[...] = (
            jnp.dot(h, wf_ref[...], preferred_element_type=jnp.float32)
            + bf_ref[...])


def _vmem_limit_bytes():
    # 128 MiB VMEM parts (v5e / v6e) get a bigger budget; default stays conservative
    # for v7x's 64 MiB physical VMEM per TensorCore (and unknown chips).
    try:
        kind = jax.devices()[0].device_kind.lower()
    except Exception:
        kind = ""
    if ("v5" in kind) or ("v6" in kind):
        return 100 * 1024 * 1024
    return 44 * 1024 * 1024


def classifier_forward(ids, xmsk, emb_table, wp, bp, wf, bf, *, tb=None, ts=None):
    V, E = emb_table.shape
    L = wf.shape[1]
    B, S = ids.shape

    LP = _round_up(L, 128)   # lane-align only the tiny label dim (lane-dense output store)

    # Batch tile: a small sublane-aligned tile (8) when possible so the "parallel" batch
    # axis has multiple blocks and shards across v7x's two TensorCores; otherwise the
    # full (small/odd) batch stays in a single block.
    if tb is None:
        TB = 8 if (B % 8 == 0) else B
    else:
        TB = tb
    assert B % TB == 0, "batch must divide the batch tile"

    vmem_budget = _vmem_limit_bytes()

    # Seq tile: stream several MiB of x per grid step (amortizes ~0.35us step overhead)
    # while keeping double-buffered x well inside the per-generation VMEM budget.
    if ts is None:
        if S <= 1024:
            TS = S
        else:
            tok_bytes = TB * E * 2                                   # bf16 bytes per token slab
            TS = max(128, ((8 * 1024 * 1024) // tok_bytes // 128) * 128)
            max_tok = max(128, (vmem_budget // 3) // (2 * tok_bytes))
            TS = min(TS, (max_tok // 128) * 128, _round_up(S, 128))
    else:
        TS = ts

    # Pad the sequence with zero-weight tokens so the seq axis always tiles cleanly
    # (exact: padded positions carry mask weight 0).
    S_pad = _round_up(S, TS)
    pad_s = S_pad - S
    ids_p = jnp.pad(ids, ((0, 0), (0, pad_s))) if pad_s else ids
    msk_p = jnp.pad(xmsk, ((0, 0), (0, pad_s))) if pad_s else xmsk

    # Token-embedding gather stays in XLA: rows are only E*2 bytes here, so a per-row
    # in-kernel DMA gather would be descriptor-bound.
    x = emb_table.astype(jnp.bfloat16)[ids_p]                        # (B, S_pad, E) bf16

    # Exact 0/1 bf16 mask for the MXU; f32 reciprocal count applied at finalize.
    m_b16 = msk_p.astype(jnp.bfloat16)                               # (B, S_pad)
    inv_cnt = 1.0 / jnp.maximum(
        jnp.sum(xmsk.astype(jnp.float32), axis=1, keepdims=True), 1.0)   # (B, 1) f32

    # Pad only what the lane-dense output store needs (padded logits are exactly 0).
    wp_p = wp.astype(jnp.float32)
    bp_p = bp.reshape(1, -1).astype(jnp.float32)
    wf_p = jnp.pad(wf.astype(jnp.float32), ((0, 0), (0, LP - L)))
    bf_p = jnp.pad(bf.reshape(1, -1).astype(jnp.float32), ((0, 0), (0, LP - L)))

    cost = pl.CostEstimate(
        flops=2 * B * S_pad * E + 2 * B * E * E + 2 * B * E * LP,
        transcendentals=B * E,
        bytes_accessed=(B * S_pad * E * 2 + B * S_pad * 2 + B * 4
                        + E * E * 4 + E * 4 + E * LP * 4 + LP * 4 + B * LP * 4),
    )

    out_p = pl.pallas_call(
        classifier_kernel,
        out_shape=jax.ShapeDtypeStruct((B, LP), jnp.float32),
        grid_spec=pltpu.PrefetchScalarGridSpec(
            num_scalar_prefetch=0,
            grid=(B // TB, S_pad // TS),
            in_specs=[
                pl.BlockSpec((TB, TS, E), lambda bi, si: (bi, si, 0)),   # x (bf16, E full)
                pl.BlockSpec((TB, TS), lambda bi, si: (bi, si)),         # 0/1 mask (bf16)
                pl.BlockSpec((TB, 1), lambda bi, si: (bi, 0)),           # 1/count (f32)
                pl.BlockSpec((E, E), lambda bi, si: (0, 0)),             # wp
                pl.BlockSpec((1, E), lambda bi, si: (0, 0)),             # bp
                pl.BlockSpec((E, LP), lambda bi, si: (0, 0)),            # wf (lane-padded)
                pl.BlockSpec((1, LP), lambda bi, si: (0, 0)),            # bf (lane-padded)
            ],
            out_specs=pl.BlockSpec((TB, LP), lambda bi, si: (bi, 0)),
            scratch_shapes=[pltpu.VMEM((TB, E), jnp.float32)],           # pooled accumulator
        ),
        compiler_params=pltpu.CompilerParams(
            dimension_semantics=("parallel", "arbitrary"),   # batch across TCs; seq is reduction
            vmem_limit_bytes=vmem_budget,
        ),
        cost_estimate=cost,
    )(x, m_b16, inv_cnt, wp_p, bp_p, wf_p, bf_p)

    return out_p[:, :L]   # drop lane padding


if __name__ == "__main__":
    # Small deterministic shapes consistent with the module's forward:
    #   ids/xmsk: (batch=2, seq=8), embed_size=32, n_labels=4, vocab=100
    B, S, E, L, V = 2, 8, 32, 4, 100

    key = jax.random.PRNGKey(0)
    k_ids, k_emb, k_wp, k_bp, k_wf, k_bf = jax.random.split(key, 6)

    ids = jax.random.randint(k_ids, (B, S), 0, V, dtype=jnp.int32)
    xmsk = jnp.concatenate(
        [jnp.ones((B, S - 2), jnp.int32), jnp.zeros((B, 2), jnp.int32)], axis=1
    )  # last 2 positions are padding

    emb_table = jax.random.normal(k_emb, (V, E), jnp.float32) * 0.02
    wp = jax.random.normal(k_wp, (E, E), jnp.float32) * 0.05   # pooler dense
    bp = jax.random.normal(k_bp, (1, E), jnp.float32) * 0.01
    wf = jax.random.normal(k_wf, (E, L), jnp.float32) * 0.05   # fc (transposed vs torch (L,E))
    bf = jax.random.normal(k_bf, (1, L), jnp.float32) * 0.01

    fwd = jax.jit(classifier_forward)
    out = fwd(ids, xmsk, emb_table, wp, bp, wf, bf)
    jax.block_until_ready(out)

    # Pure-JAX reference using the SAME bf16-quantized embedding storage as the kernel path.
    hp = jax.lax.Precision.HIGHEST
    x_ref = emb_table.astype(jnp.bfloat16)[ids].astype(jnp.float32)
    m = xmsk.astype(jnp.float32)
    pooled = jnp.einsum('bs,bse->be', m, x_ref, precision=hp)
    pooled = pooled / jnp.maximum(jnp.sum(m, axis=1, keepdims=True), 1.0)
    h = jnp.tanh(jnp.dot(pooled, wp, precision=hp) + bp)
    ref = jnp.dot(h, wf, precision=hp) + bf

    assert out.shape == (B, L)
    assert jnp.allclose(out, ref, atol=1e-4), "mismatch vs reference"
    print("KERNEL_OK")
</pallas_src>

<mosaic_0001>
module attributes {stable_mosaic.version = 11 : i64} {
  func.func @classifier_kernel(%arg0: i32, %arg1: i32, %arg2: memref<2x8x32xbf16, #tpu.memory_space<vmem>>, %arg3: memref<2x8xbf16, #tpu.memory_space<vmem>>, %arg4: memref<2x1xf32, #tpu.memory_space<vmem>>, %arg5: memref<32x32xf32, #tpu.memory_space<vmem>>, %arg6: memref<1x32xf32, #tpu.memory_space<vmem>>, %arg7: memref<32x128xf32, #tpu.memory_space<vmem>>, %arg8: memref<1x128xf32, #tpu.memory_space<vmem>>, %arg9: memref<2x128xf32, #tpu.memory_space<vmem>>, %arg10: memref<2x32xf32, #tpu.memory_space<vmem>>) attributes {dimension_semantics = [#tpu.dimension_semantics<parallel>, #tpu.dimension_semantics<arbitrary>], iteration_bounds = array<i64: 1, 1>, scalar_prefetch = 0 : i64, scratch_operands = 1 : i64, tpu.core_type = #tpu.core_type<tc>, window_params = [{transform_indices = @transform_0, window_bounds = array<i64: 2, 8, 32>}, {transform_indices = @transform_1, window_bounds = array<i64: 2, 8>}, {transform_indices = @transform_2, window_bounds = array<i64: 2, 1>}, {pipeline_mode = #tpu.pipeline_mode<synchronous>, transform_indices = @transform_3, window_bounds = array<i64: 32, 32>}, {pipeline_mode = #tpu.pipeline_mode<synchronous>, transform_indices = @transform_4, window_bounds = array<i64: 1, 32>}, {pipeline_mode = #tpu.pipeline_mode<synchronous>, transform_indices = @transform_5, window_bounds = array<i64: 32, 128>}, {pipeline_mode = #tpu.pipeline_mode<synchronous>, transform_indices = @transform_6, window_bounds = array<i64: 1, 128>}, {transform_indices = @transform_7, window_bounds = array<i64: 2, 128>}]} {
    %c0_i32 = arith.constant 0 : i32
    %0 = arith.cmpi eq, %arg1, %c0_i32 : i32
    %1 = arith.extui %0 : i1 to i32
    %c0_i32_0 = arith.constant 0 : i32
    %2 = arith.cmpi ne, %1, %c0_i32_0 : i32
    scf.if %2 {
      %cst_20 = arith.constant 0.000000e+00 : f32
      %20 = vector.broadcast %cst_20 : f32 to vector<2x32xf32>
      %c0_21 = arith.constant 0 : index
      %c0_22 = arith.constant 0 : index
      %21 = vector.load %arg10[%c0_21, %c0_22] : memref<2x32xf32, #tpu.memory_space<vmem>>, vector<2x32xf32>
      tpu.vector_store %arg10[%c0_21, %c0_22], %20 {strides = array<i32>} : memref<2x32xf32, #tpu.memory_space<vmem>>, vector<2x32xf32>,
    } else {
    }
    %c0 = arith.constant 0 : index
    %c0_1 = arith.constant 0 : index
    %3 = vector.load %arg10[%c0, %c0_1] : memref<2x32xf32, #tpu.memory_space<vmem>>, vector<1x32xf32>
    %c0_2 = arith.constant 0 : index
    %c0_3 = arith.constant 0 : index
    %4 = vector.load %arg3[%c0_2, %c0_3] : memref<2x8xbf16, #tpu.memory_space<vmem>>, vector<1x8xbf16>
    %c0_4 = arith.constant 0 : index
    %c0_5 = arith.constant 0 : index
    %c0_6 = arith.constant 0 : index
    %5 = vector.load %arg2[%c0_4, %c0_5, %c0_6] : memref<2x8x32xbf16, #tpu.memory_space<vmem>>, vector<1x8x32xbf16>
    %6 = vector.shape_cast %5 : vector<1x8x32xbf16> to vector<8x32xbf16>
    %cst = arith.constant dense<0.000000e+00> : vector<1x32xf32>
    %7 = tpu.matmul %4, %6, %cst {dimension_numbers = #tpu.dot_dimension_numbers<[1], [0], [0], [1], [0, 0, 1, 1], [], []>} : vector<1x8xbf16>, vector<8x32xbf16>, vector<1x32xf32> -> vector<1x32xf32>
    %8 = arith.addf %3, %7 : vector<1x32xf32>
    %c0_7 = arith.constant 0 : index
    %c0_8 = arith.constant 0 : index
    %9 = vector.load %arg10[%c0_7, %c0_8] : memref<2x32xf32, #tpu.memory_space<vmem>>, vector<1x32xf32>
    tpu.vector_store %arg10[%c0_7, %c0_8], %8 {strides = array<i32>} : memref<2x32xf32, #tpu.memory_space<vmem>>, vector<1x32xf32>,
    %c1 = arith.constant 1 : index
    %c0_9 = arith.constant 0 : index
    %10 = vector.load %arg10[%c1, %c0_9] : memref<2x32xf32, #tpu.memory_space<vmem>>, vector<1x32xf32>
    %c1_10 = arith.constant 1 : index
    %c0_11 = arith.constant 0 : index
    %11 = vector.load %arg3[%c1_10, %c0_11] : memref<2x8xbf16, #tpu.memory_space<vmem>>, vector<1x8xbf16>
    %c1_12 = arith.constant 1 : index
    %c0_13 = arith.constant 0 : index
    %c0_14 = arith.constant 0 : index
    %12 = vector.load %arg2[%c1_12, %c0_13, %c0_14] : memref<2x8x32xbf16, #tpu.memory_space<vmem>>, vector<1x8x32xbf16>
    %13 = vector.shape_cast %12 : vector<1x8x32xbf16> to vector<8x32xbf16>
    %cst_15 = arith.constant dense<0.000000e+00> : vector<1x32xf32>
    %14 = tpu.matmul %11, %13, %cst_15 {dimension_numbers = #tpu.dot_dimension_numbers<[1], [0], [0], [1], [0, 0, 1, 1], [], []>} : vector<1x8xbf16>, vector<8x32xbf16>, vector<1x32xf32> -> vector<1x32xf32>
    %15 = arith.addf %10, %14 : vector<1x32xf32>
    %c1_16 = arith.constant 1 : index
    %c0_17 = arith.constant 0 : index
    %16 = vector.load %arg10[%c1_16, %c0_17] : memref<2x32xf32, #tpu.memory_space<vmem>>, vector<1x32xf32>
    tpu.vector_store %arg10[%c1_16, %c0_17], %15 {strides = array<i32>} : memref<2x32xf32, #tpu.memory_space<vmem>>, vector<1x32xf32>,
    %c0_i32_18 = arith.constant 0 : i32
    %17 = arith.cmpi eq, %arg1, %c0_i32_18 : i32
    %18 = arith.extui %17 : i1 to i32
    %c0_i32_19 = arith.constant 0 : i32
    %19 = arith.cmpi ne, %18, %c0_i32_19 : i32
    scf.if %19 {
      %c0_20 = arith.constant 0 : index
      %c0_21 = arith.constant 0 : index
      %20 = vector.load %arg10[%c0_20, %c0_21] : memref<2x32xf32, #tpu.memory_space<vmem>>, vector<2x32xf32>
      %c0_22 = arith.constant 0 : index
      %c0_23 = arith.constant 0 : index
      %21 = vector.load %arg4[%c0_22, %c0_23] : memref<2x1xf32, #tpu.memory_space<vmem>>, vector<2x1xf32>
      %22 = vector.broadcast %21 : vector<2x1xf32> to vector<2x32xf32>
      %23 = arith.mulf %20, %22 : vector<2x32xf32>
      %c0_24 = arith.constant 0 : index
      %c0_25 = arith.constant 0 : index
      %24 = vector.load %arg5[%c0_24, %c0_25] : memref<32x32xf32, #tpu.memory_space<vmem>>, vector<32x32xf32>
      %cst_26 = arith.constant dense<0.000000e+00> : vector<2x32xf32>
      %25 = tpu.matmul %23, %24, %cst_26 {dimension_numbers = #tpu.dot_dimension_numbers<[1], [0], [0], [1], [0, 0, 1, 1], [], []>} : vector<2x32xf32>, vector<32x32xf32>, vector<2x32xf32> -> vector<2x32xf32>
      %c0_27 = arith.constant 0 : index
      %c0_28 = arith.constant 0 : index
      %26 = vector.load %arg6[%c0_27, %c0_28] : memref<1x32xf32, #tpu.memory_space<vmem>>, vector<1x32xf32>
      %27 = vector.broadcast %26 : vector<1x32xf32> to vector<2x32xf32>
      %28 = arith.addf %25, %27 : vector<2x32xf32>
      %29 = math.tanh %28 : vector<2x32xf32>
      %c0_29 = arith.constant 0 : index
      %c0_30 = arith.constant 0 : index
      %30 = vector.load %arg7[%c0_29, %c0_30] : memref<32x128xf32, #tpu.memory_space<vmem>>, vector<32x128xf32>
      %cst_31 = arith.constant dense<0.000000e+00> : vector<2x128xf32>
      %31 = tpu.matmul %29, %30, %cst_31 {dimension_numbers = #tpu.dot_dimension_numbers<[1], [0], [0], [1], [0, 0, 1, 1], [], []>} : vector<2x32xf32>, vector<32x128xf32>, vector<2x128xf32> -> vector<2x128xf32>
      %c0_32 = arith.constant 0 : index
      %c0_33 = arith.constant 0 : index
      %32 = vector.load %arg8[%c0_32, %c0_33] : memref<1x128xf32, #tpu.memory_space<vmem>>, vector<1x128xf32>
      %33 = vector.broadcast %32 : vector<1x128xf32> to vector<2x128xf32>
      %34 = arith.addf %31, %33 : vector<2x128xf32>
      %c0_34 = arith.constant 0 : index
      %c0_35 = arith.constant 0 : index
      %35 = vector.load %arg9[%c0_34, %c0_35] : memref<2x128xf32, #tpu.memory_space<vmem>>, vector<2x128xf32>
      tpu.vector_store %arg9[%c0_34, %c0_35], %34 {strides = array<i32>} : memref<2x128xf32, #tpu.memory_space<vmem>>, vector<2x128xf32>,
    } else {
    }
    return
  }
  func.func @transform_0(%arg0: i32, %arg1: i32) -> (i32, i32, i32) {
    %c0_i32 = arith.constant 0 : i32
    %c0_i32_0 = arith.constant 0 : i32
    return %arg0, %arg1, %c0_i32 : i32, i32, i32
  }
  func.func @transform_1(%arg0: i32, %arg1: i32) -> (i32, i32) {
    %c0_i32 = arith.constant 0 : i32
    return %arg0, %arg1 : i32, i32
  }
  func.func @transform_2(%arg0: i32, %arg1: i32) -> (i32, i32) {
    %c0_i32 = arith.constant 0 : i32
    %c0_i32_0 = arith.constant 0 : i32
    return %arg0, %c0_i32 : i32, i32
  }
  func.func @transform_3(%arg0: i32, %arg1: i32) -> (i32, i32) {
    %c0_i32 = arith.constant 0 : i32
    %c0_i32_0 = arith.constant 0 : i32
    %c0_i32_1 = arith.constant 0 : i32
    return %c0_i32, %c0_i32_0 : i32, i32
  }
  func.func @transform_4(%arg0: i32, %arg1: i32) -> (i32, i32) {
    %c0_i32 = arith.constant 0 : i32
    %c0_i32_0 = arith.constant 0 : i32
    %c0_i32_1 = arith.constant 0 : i32
    return %c0_i32, %c0_i32_0 : i32, i32
  }
  func.func @transform_5(%arg0: i32, %arg1: i32) -> (i32, i32) {
    %c0_i32 = arith.constant 0 : i32
    %c0_i32_0 = arith.constant 0 : i32
    %c0_i32_1 = arith.constant 0 : i32
    return %c0_i32, %c0_i32_0 : i32, i32
  }
  func.func @transform_6(%arg0: i32, %arg1: i32) -> (i32, i32) {
    %c0_i32 = arith.constant 0 : i32
    %c0_i32_0 = arith.constant 0 : i32
    %c0_i32_1 = arith.constant 0 : i32
    return %c0_i32, %c0_i32_0 : i32, i32
  }
  func.func @transform_7(%arg0: i32, %arg1: i32) -> (i32, i32) {
    %c0_i32 = arith.constant 0 : i32
    %c0_i32_0 = arith.constant 0 : i32
    return %arg0, %c0_i32 : i32, i32
  }
}

</mosaic_0001>

<llo_original>
// kernel: classifier_forward.1
$region0: #{classifier_forward.1}
  #allocation0 [shape = 'u32[]', space=smem, size = 0x4, offset = 0x4, fixed_abs, tag = 'smem constant byte address 0x4 - core index']
  #allocation1 [shape = 'u32[144,128]{1,0:T(1,128)}', space=vmem, size = 0x12000, scoped, tag = 'internal scratch']
  #allocation2 [shape = 'f32[2,32]{1,0:T(2,128)}', space=vmem, size = 0x400, scoped, tag = 'scratch operand']
  %s0 = inlined_call_operand.vmem [shape: bf16[2,8,32], index: 0, kind: input, shape index: {}]
  %s1 = inlined_call_operand.vmem [shape: bf16[2,8], index: 1, kind: input, shape index: {}]
  %s2 = inlined_call_operand.vmem [shape: f32[2,1], index: 2, kind: input, shape index: {}]
  %s3 = inlined_call_operand.vmem [shape: f32[32,32], index: 3, kind: input, shape index: {}]
  %s4 = inlined_call_operand.vmem [shape: f32[1,32], index: 4, kind: input, shape index: {}]
  %s5 = inlined_call_operand.vmem [shape: f32[32,128], index: 5, kind: input, shape index: {}]
  %s6 = inlined_call_operand.vmem [shape: f32[1,128], index: 6, kind: input, shape index: {}]
  %s7 = inlined_call_operand.hbm [shape: f32[2,128], index: 7, kind: output, shape index: {}]
  %s8 = sld [smem:[#allocation0]]
  $region46: #{classifier_forward.1} parent=0
    _
  %s10 = ssub.s32 1, %s8
  %s11 = scalar_select 0, %s10, %s8
  $region1: #{classifier_forward.1} parent=0
    #allocation3 [shape = 'u8[1024]{0}', space=vmem, size = 0x400, scoped, tag = 'output window, operand 0, single buffered']
    #allocation4 [shape = 's32[1]{0}', space=sflag, size = 0x4, scoped, tag = 'scoped memory for classifier_forward.1']
    %12 = vsyncpa [#allocation4], 0
    // Predicated region
    $region2: #{classifier_forward.1} parent=1 // pred_check
      _
    $region3: #{classifier_forward.1} parent=1 // pred_check_branch
      %14 = sbr.rel (0) target = $region5
    $region4: #{classifier_forward.1} parent=1 // pred_region
      _
    $region5: #{classifier_forward.1} parent=1 // pred_fallthru
      _
    // Predicated region
    $region6: #{classifier_forward.1} parent=1 // pred_check
      _
    $region7: #{classifier_forward.1} parent=1 // pred_check_branch
      %16 = sbr.rel (0) target = $region9
    $region8: #{classifier_forward.1} parent=1 // pred_region
      _
    $region9: #{classifier_forward.1} parent=1 // pred_fallthru
      _
    // Predicated region
    $region10: #{classifier_forward.1} parent=1 // pred_check
      _
    $region11: #{classifier_forward.1} parent=1 // pred_check_branch
      %18 = sbr.rel (0) target = $region13
    $region12: #{classifier_forward.1} parent=1 // pred_region
      _
    $region13: #{classifier_forward.1} parent=1 // pred_fallthru
      _
    // Predicated region
    $region14: #{classifier_forward.1} parent=1 // pred_check
      _
    $region15: #{classifier_forward.1} parent=1 // pred_check_branch
      %20 = sbr.rel (0) target = $region17
    $region16: #{classifier_forward.1} parent=1 // pred_region
      _
    $region17: #{classifier_forward.1} parent=1 // pred_fallthru
      _
    // Predicated region
    $region18: #{classifier_forward.1} parent=1 // pred_check
      _
    $region19: #{classifier_forward.1} parent=1 // pred_check_branch
      %22 = sbr.rel (0) target = $region21
    $region20: #{classifier_forward.1} parent=1 // pred_region
      _
    $region21: #{classifier_forward.1} parent=1 // pred_fallthru
      _
    // Predicated region
    $region22: #{classifier_forward.1} parent=1 // pred_check
      _
    $region23: #{classifier_forward.1} parent=1 // pred_check_branch
      %24 = sbr.rel (0) target = $region25
    $region24: #{classifier_forward.1} parent=1 // pred_region
      _
    $region25: #{classifier_forward.1} parent=1 // pred_fallthru
      _
    // Predicated region
    $region26: #{classifier_forward.1} parent=1 // pred_check
      _
    $region27: #{classifier_forward.1} parent=1 // pred_check_branch
      %26 = sbr.rel (0) target = $region29
    $region28: #{classifier_forward.1} parent=1 // pred_region
      _
    $region29: #{classifier_forward.1} parent=1 // pred_fallthru
      _
    %p28 = scmp.eq.s32.totalorder 0, 0
    // Predicated region
    $region30: #{classifier_forward.1} parent=1 // pred_check
      %p29 = pneg %p28
    $region31: #{classifier_forward.1} parent=1 // pred_check_branch
      %31 = sbr.rel (%p29) target = $region33
    $region32: #{classifier_forward.1} parent=1 // pred_region
      %vm32 = vcmask 254976
      %33 = vst.msk [vmem:[#allocation2] sm:$0x3] %vm32, 0.0
    $region33: #{classifier_forward.1} parent=1 // pred_fallthru
      _
    %v34 = vld [vmem:[#allocation2] sm:$0x1]
    %v35 = vld [vmem:[%s1] sm:$0x1]
    %v36 = vld [vmem:[%s0] sm:$0xf]
    %vm37 = vcmask 64512
    %v39 = vsel %vm37, %v35, 0
    %vm41 = vcmask 1043456
    %v43 = vsel %vm41, %v36, 0
    %45 = vmatprep.subr.bf16.mxu0 0
    %46 = vmatpush1.bf16.msra.mxu0 %v43
    %47 = vmatprep.subr.bf16.mxu0 0
    %48 = vmatpush1.bf16.msra.mxu0 0
    %49 = vmatprep.subr.bf16.mxu0 0
    %50 = vmatpush1.bf16.msra.mxu0 0
    %51 = vmatprep.subr.bf16.mxu0 0
    %52 = vmatpush1.bf16.msra.mxu0 0
    %53 = vmatprep.subr.bf16.mxu0 0
    %54 = vmatpush1.bf16.msra.mxu0 0
    %55 = vmatprep.subr.bf16.mxu0 0
    %56 = vmatpush1.bf16.msra.mxu0 0
    %57 = vmatprep.subr.bf16.mxu0 0
    %58 = vmatpush1.bf16.msra.mxu0 0
    %59 = vmatprep.subr.bf16.mxu0 0
    %60 = vmatpush1.bf16.msra.mxu0 0
    %61 = vmatprep.subr.bf16.mxu0 0
    %62 = vmatpush1.bf16.msra.mxu0 0
    %63 = vmatprep.subr.bf16.mxu0 0
    %64 = vmatpush1.bf16.msra.mxu0 0
    %65 = vmatprep.subr.bf16.mxu0 0
    %66 = vmatpush1.bf16.msra.mxu0 0
    %67 = vmatprep.subr.bf16.mxu0 0
    %68 = vmatpush1.bf16.msra.mxu0 0
    %69 = vmatprep.subr.bf16.mxu0 0
    %70 = vmatpush1.bf16.msra.mxu0 0
    %71 = vmatprep.subr.bf16.mxu0 0
    %72 = vmatpush1.bf16.msra.mxu0 0
    %73 = vmatprep.subr.bf16.mxu0 0
    %74 = vmatpush1.bf16.msra.mxu0 0
    %75 = vmatprep.subr.bf16.mxu0 0
    %76 = vmatpush1.bf16.msra.mxu0 0
    %77 = vmatprep.mubr.bf16.mxu0 0
    %78 = vmatmul.mubr.bf16.gmra.mrb[0].mxu0 %v39
    %v79 = vpop.f32.mrb[0].mxu0
    %v80 = vadd.f32 0.0, %v79
    %v81 = vpop.f32.mrb[0].mxu0
    %v82 = vpop.f32.mrb[0].mxu0
    %v83 = vpop.f32.mrb[0].mxu0
    %84 = vdwg.mxu0
    %v85 = vadd.f32 %v34, %v80
    %vm86 = vcmask 253952
    %87 = vst.msk [vmem:[#allocation2] sm:$0x1] %vm86, %v85
    %v88 = vld [vmem:[#allocation2 + $0x1] sm:$0x1]
    %v89 = vld [vmem:[%s1] sm:$0x1]
    %s90 = scalar_lea.vmem %s0, 4
    %v91 = vld [vmem:[%s90] sm:$0xf]
    %v94 = vunpack.c.l.s4 1966171168
    %v95 = vunpack.c.0.s8 %v94
    %v96 = vlaneseq
    %v97 = vshrl.u32 %v96, 7
    %v98 = vsub.s32 %v95, %v97
    %v99 = vrot.slane %v89, %v98
    %v101 = vunpack.c.l.s4 1966171168
    %v102 = vunpack.c.0.s8 %v101
    %v103 = vlaneseq
    %v104 = vshrl.u32 %v103, 7
    %v105 = vsub.s32 %v102, %v104
    %v106 = vrot.slane %v99, %v105
    %v108 = vshrl.u32 %v106, 16
    %v111 = vsel %vm37, %v108, 0
    %v114 = vsel %vm41, %v91, 0
    %116 = vmatprep.subr.bf16.mxu0 0
    %117 = vmatpush1.bf16.msra.mxu0 %v114
    %118 = vmatprep.subr.bf16.mxu0 0
    %119 = vmatpush1.bf16.msra.mxu0 0
    %120 = vmatprep.subr.bf16.mxu0 0
    %121 = vmatpush1.bf16.msra.mxu0 0
    %122 = vmatprep.subr.bf16.mxu0 0
    %123 = vmatpush1.bf16.msra.mxu0 0
    %124 = vmatprep.subr.bf16.mxu0 0
    %125 = vmatpush1.bf16.msra.mxu0 0
    %126 = vmatprep.subr.bf16.mxu0 0
    %127 = vmatpush1.bf16.msra.mxu0 0
    %128 = vmatprep.subr.bf16.mxu0 0
    %129 = vmatpush1.bf16.msra.mxu0 0
    %130 = vmatprep.subr.bf16.mxu0 0
    %131 = vmatpush1.bf16.msra.mxu0 0
    %132 = vmatprep.subr.bf16.mxu0 0
    %133 = vmatpush1.bf16.msra.mxu0 0
    %134 = vmatprep.subr.bf16.mxu0 0
    %135 = vmatpush1.bf16.msra.mxu0 0
    %136 = vmatprep.subr.bf16.mxu0 0
    %137 = vmatpush1.bf16.msra.mxu0 0
    %138 = vmatprep.subr.bf16.mxu0 0
    %139 = vmatpush1.bf16.msra.mxu0 0
    %140 = vmatprep.subr.bf16.mxu0 0
    %141 = vmatpush1.bf16.msra.mxu0 0
    %142 = vmatprep.subr.bf16.mxu0 0
    %143 = vmatpush1.bf16.msra.mxu0 0
    %144 = vmatprep.subr.bf16.mxu0 0
    %145 = vmatpush1.bf16.msra.mxu0 0
    %146 = vmatprep.subr.bf16.mxu0 0
    %147 = vmatpush1.bf16.msra.mxu0 0
    %148 = vmatprep.mubr.bf16.mxu0 0
    %149 = vmatmul.mubr.bf16.gmra.mrb[0].mxu0 %v111
    %v150 = vpop.f32.mrb[0].mxu0
    %v151 = vadd.f32 0.0, %v150
    %v152 = vpop.f32.mrb[0].mxu0
    %v153 = vpop.f32.mrb[0].mxu0
    %v154 = vpop.f32.mrb[0].mxu0
    %155 = vdwg.mxu0
    %v156 = vadd.f32 %v88, %v151
    %157 = vst.msk [vmem:[#allocation2 + $0x1] sm:$0x1] %vm86, %v156
    // Predicated region
    $region34: #{classifier_forward.1} parent=1 // pred_check
      %p158 = pneg %p28
    $region35: #{classifier_forward.1} parent=1 // pred_check_branch
      %160 = sbr.rel (%p158) target = $region37
    $region36: #{classifier_forward.1} parent=1 // pred_region
      %v161 = vld [vmem:[#allocation2] sm:$0x3]
      %v162 = vld [vmem:[%s2] sm:$0x3]
      %164 = vset.pattern.permute.xlu0 0
      %165 = vperm.xlu0 %164, %v162
      %v166 = vpop.permute.xlu0 %165
      %v168 = vmul.f32 %v161, %v166
      %v169 = vld [vmem:[%s3] sm:$0xff]
      %v170 = vld [vmem:[%s3 + $0x8] sm:$0xff]
      %v171 = vld [vmem:[%s3 + $0x10] sm:$0xff]
      %v172 = vld [vmem:[%s3 + $0x18] sm:$0xff]
      %v173 = vld [vmem:[%s4] sm:$0x1]
      %v175 = vlaneseq
      %v176 = vshrl.u32 %v175, 7
      %v177 = vsub.s32 0, %v176
      %v178 = vrot.slane %v173, %v177
      %vm180 = vcmask 261120
      %v182 = vsel %vm180, %v168, 0
      %184 = vmatprep.subr.mxu0 0.0
      %185 = vmatpush1.msra.mxu0 %v169
      %186 = vmatprep.subr.mxu0 0.0
      %187 = vmatpush1.msra.mxu0 %v170
      %188 = vmatprep.subr.mxu0 0.0
      %189 = vmatpush1.msra.mxu0 %v171
      %190 = vmatprep.subr.mxu0 0.0
      %191 = vmatpush1.msra.mxu0 %v172
      %192 = vmatprep.subr.mxu0 0.0
      %193 = vmatpush1.msra.mxu0 0.0
      %194 = vmatprep.subr.mxu0 0.0
      %195 = vmatpush1.msra.mxu0 0.0
      %196 = vmatprep.subr.mxu0 0.0
      %197 = vmatpush1.msra.mxu0 0.0
      %198 = vmatprep.subr.mxu0 0.0
      %199 = vmatpush1.msra.mxu0 0.0
      %200 = vmatprep.subr.mxu0 0.0
      %201 = vmatpush1.msra.mxu0 0.0
      %202 = vmatprep.subr.mxu0 0.0
      %203 = vmatpush1.msra.mxu0 0.0
      %204 = vmatprep.subr.mxu0 0.0
      %205 = vmatpush1.msra.mxu0 0.0
      %206 = vmatprep.subr.mxu0 0.0
      %207 = vmatpush1.msra.mxu0 0.0
      %208 = vmatprep.subr.mxu0 0.0
      %209 = vmatpush1.msra.mxu0 0.0
      %210 = vmatprep.subr.mxu0 0.0
      %211 = vmatpush1.msra.mxu0 0.0
      %212 = vmatprep.subr.mxu0 0.0
      %213 = vmatpush1.msra.mxu0 0.0
      %214 = vmatprep.subr.mxu0 0.0
      %215 = vmatpush1.msra.mxu0 0.0
      %216 = vmatprep.subr.mxu0 0.0
      %217 = vmatpush1.msra.mxu0 0.0
      %218 = vmatprep.subr.mxu0 0.0
      %219 = vmatpush1.msra.mxu0 0.0
      %220 = vmatprep.subr.mxu0 0.0
      %221 = vmatpush1.msra.mxu0 0.0
      %222 = vmatprep.subr.mxu0 0.0
      %223 = vmatpush1.msra.mxu0 0.0
      %224 = vmatprep.subr.mxu0 0.0
      %225 = vmatpush1.msra.mxu0 0.0
      %226 = vmatprep.subr.mxu0 0.0
      %227 = vmatpush1.msra.mxu0 0.0
      %228 = vmatprep.subr.mxu0 0.0
      %229 = vmatpush1.msra.mxu0 0.0
      %230 = vmatprep.subr.mxu0 0.0
      %231 = vmatpush1.msra.mxu0 0.0
      %232 = vmatprep.subr.mxu0 0.0
      %233 = vmatpush1.msra.mxu0 0.0
      %234 = vmatprep.subr.mxu0 0.0
      %235 = vmatpush1.msra.mxu0 0.0
      %236 = vmatprep.subr.mxu0 0.0
      %237 = vmatpush1.msra.mxu0 0.0
      %238 = vmatprep.subr.mxu0 0.0
      %239 = vmatpush1.msra.mxu0 0.0
      %240 = vmatprep.subr.mxu0 0.0
      %241 = vmatpush1.msra.mxu0 0.0
      %242 = vmatprep.subr.mxu0 0.0
      %243 = vmatpush1.msra.mxu0 0.0
      %244 = vmatprep.subr.mxu0 0.0
      %245 = vmatpush1.msra.mxu0 0.0
      %246 = vmatprep.subr.mxu0 0.0
      %247 = vmatpush1.msra.mxu0 0.0
      %248 = vmatprep.mubr.f32.mxu0 0.0
      %249 = vmatmul.mubr.f32.gmra.mrb[0].mxu0 %v182
      %v250 = vpop.f32.mrb[0].mxu0
      %v251 = vadd.f32 %v178, %v250
      %v252 = vpop.f32.mrb[0].mxu0
      %253 = vdwg.mxu0
      %v254 = vtanh.pop %v251
      %v255 = vld [vmem:[%s5] sm:$0xff]
      %v256 = vld [vmem:[%s5 + $0x8] sm:$0xff]
      %v257 = vld [vmem:[%s5 + $0x10] sm:$0xff]
      %v258 = vld [vmem:[%s5 + $0x18] sm:$0xff]
      %v259 = vld [vmem:[%s6] sm:$0x1]
      %v261 = vlaneseq
      %v262 = vshrl.u32 %v261, 7
      %v263 = vsub.s32 0, %v262
      %v264 = vrot.slane %v259, %v263
      %v267 = vsel %vm180, %v254, 0
      %269 = vmatprep.subr.mxu0 0.0
      %270 = vmatpush1.msra.mxu0 %v255
      %271 = vmatprep.subr.mxu0 0.0
      %272 = vmatpush1.msra.mxu0 %v256
      %273 = vmatprep.subr.mxu0 0.0
      %274 = vmatpush1.msra.mxu0 %v257
      %275 = vmatprep.subr.mxu0 0.0
      %276 = vmatpush1.msra.mxu0 %v258
      %277 = vmatprep.subr.mxu0 0.0
      %278 = vmatpush1.msra.mxu0 0.0
      %279 = vmatprep.subr.mxu0 0.0
      %280 = vmatpush1.msra.mxu0 0.0
      %281 = vmatprep.subr.mxu0 0.0
      %282 = vmatpush1.msra.mxu0 0.0
      %283 = vmatprep.subr.mxu0 0.0
      %284 = vmatpush1.msra.mxu0 0.0
      %285 = vmatprep.subr.mxu0 0.0
      %286 = vmatpush1.msra.mxu0 0.0
      %287 = vmatprep.subr.mxu0 0.0
      %288 = vmatpush1.msra.mxu0 0.0
      %289 = vmatprep.subr.mxu0 0.0
      %290 = vmatpush1.msra.mxu0 0.0
      %291 = vmatprep.subr.mxu0 0.0
      %292 = vmatpush1.msra.mxu0 0.0
      %293 = vmatprep.subr.mxu0 0.0
      %294 = vmatpush1.msra.mxu0 0.0
      %295 = vmatprep.subr.mxu0 0.0
      %296 = vmatpush1.msra.mxu0 0.0
      %297 = vmatprep.subr.mxu0 0.0
      %298 = vmatpush1.msra.mxu0 0.0
      %299 = vmatprep.subr.mxu0 0.0
      %300 = vmatpush1.msra.mxu0 0.0
      %301 = vmatprep.subr.mxu0 0.0
      %302 = vmatpush1.msra.mxu0 0.0
      %303 = vmatprep.subr.mxu0 0.0
      %304 = vmatpush1.msra.mxu0 0.0
      %305 = vmatprep.subr.mxu0 0.0
      %306 = vmatpush1.msra.mxu0 0.0
      %307 = vmatprep.subr.mxu0 0.0
      %308 = vmatpush1.msra.mxu0 0.0
      %309 = vmatprep.subr.mxu0 0.0
      %310 = vmatpush1.msra.mxu0 0.0
      %311 = vmatprep.subr.mxu0 0.0
      %312 = vmatpush1.msra.mxu0 0.0
      %313 = vmatprep.subr.mxu0 0.0
      %314 = vmatpush1.msra.mxu0 0.0
      %315 = vmatprep.subr.mxu0 0.0
      %316 = vmatpush1.msra.mxu0 0.0
      %317 = vmatprep.subr.mxu0 0.0
      %318 = vmatpush1.msra.mxu0 0.0
      %319 = vmatprep.subr.mxu0 0.0
      %320 = vmatpush1.msra.mxu0 0.0
      %321 = vmatprep.subr.mxu0 0.0
      %322 = vmatpush1.msra.mxu0 0.0
      %323 = vmatprep.subr.mxu0 0.0
      %324 = vmatpush1.msra.mxu0 0.0
      %325 = vmatprep.subr.mxu0 0.0
      %326 = vmatpush1.msra.mxu0 0.0
      %327 = vmatprep.subr.mxu0 0.0
      %328 = vmatpush1.msra.mxu0 0.0
      %329 = vmatprep.subr.mxu0 0.0
      %330 = vmatpush1.msra.mxu0 0.0
      %331 = vmatprep.subr.mxu0 0.0
      %332 = vmatpush1.msra.mxu0 0.0
      %333 = vmatprep.mubr.f32.mxu0 0.0
      %334 = vmatmul.mubr.f32.gmra.mrb[0].mxu0 %v267
      %v335 = vpop.f32.mrb[0].mxu0
      %v336 = vadd.f32 %v264, %v335
      %v337 = vpop.f32.mrb[0].mxu0
      %338 = vdwg.mxu0
      %339 = vst [vmem:[#allocation3] sm:$0x3] %v336
    $region37: #{classifier_forward.1} parent=1 // pred_fallthru
      _
    // Predicated region
    $region38: #{classifier_forward.1} parent=1 // pred_check
      _
    $region39: #{classifier_forward.1} parent=1 // pred_check_branch
      %341 = sbr.rel (0) target = $region41
    $region40: #{classifier_forward.1} parent=1 // pred_region
      %s343 = ssub.s32 32, 32
      %344 = vsyncadd [#allocation4], %s343
      %s346 = sshll.u32 [#allocation3], 4
      %s347 = int_to_ptr.vmem [resolvable:$true] %s346
      %349 = dma.vmem_to_hbm [thread:$0]  %s347, 32, %s7, [#allocation4]
    $region41: #{classifier_forward.1} parent=1 // pred_fallthru
      _
    // Predicated region
    $region42: #{classifier_forward.1} parent=1 // pred_check
      _
    $region43: #{classifier_forward.1} parent=1 // pred_check_branch
      %351 = sbr.rel (0) target = $region45
    $region44: #{classifier_forward.1} parent=1 // pred_region
      %352 = dma.done [#allocation4], 32
    $region45: #{classifier_forward.1} parent=1 // pred_fallthru
      _
    %353 = vsyncpa [#allocation4], 1

</llo_original>
